<compile_context>
chip_gen: v7x
topology: tpu7x:2x2x1
jax: 0.10.0
libtpu: 0.0.40
codegen_flags: <defaults>
</compile_context>

<pallas_src>
import functools
import math

import jax
import jax.numpy as jnp
from jax.experimental import pallas as pl
from jax.experimental.pallas import tpu as pltpu


def _rcp(x):
    """1/x on the EUP: approx reciprocal + one Newton-Raphson refinement."""
    r = pl.reciprocal(x, approx=True)
    return r * (2.0 - x * r)


def _atan(x):
    """Elementwise arctan using VPU ops + EUP reciprocals (abs err < ~2e-7)."""
    t = jnp.abs(x)
    big = t > 1.0
    z = jnp.where(big, _rcp(t), t)                       # z in [0, 1]
    tan_pi_8 = 0.41421356237309503
    mid = z > tan_pi_8
    u = jnp.where(mid, (z - 1.0) * _rcp(z + 1.0), z)     # |u| <= tan(pi/8)
    u2 = u * u
    # odd polynomial up to u^13; next term < 1.3e-7 for |u| <= tan(pi/8)
    r = u * (1.0 + u2 * (-1.0 / 3.0 + u2 * (1.0 / 5.0 + u2 * (-1.0 / 7.0
            + u2 * (1.0 / 9.0 + u2 * (-1.0 / 11.0 + u2 * (1.0 / 13.0)))))))
    r = jnp.where(mid, 0.25 * math.pi + r, r)            # atan(z)=pi/4+atan((z-1)/(z+1))
    r = jnp.where(big, 0.5 * math.pi - r, r)             # atan(t)=pi/2-atan(1/t)
    return jnp.where(x < 0, -r, r)


def _ciou_kernel(n_ref, p_ref, t_ref, out_ref, *, tr, eps):
    c = pl.program_id(0)           # core-parallel axis
    i = pl.program_id(1)           # reduction axis (resident output block)

    @pl.when(i == 0)
    def _():
        out_ref[...] = jnp.zeros_like(out_ref)

    # Each coordinate is a (TR, 128) lane/sublane-dense slab of boxes.
    x1, y1, x2, y2 = p_ref[0], p_ref[1], p_ref[2], p_ref[3]
    x1g, y1g, x2g, y2g = t_ref[0], t_ref[1], t_ref[2], t_ref[3]

    # ---- IoU (matches torchvision _loss_inter_union) ----
    xi1 = jnp.maximum(x1, x1g)
    yi1 = jnp.maximum(y1, y1g)
    xi2 = jnp.minimum(x2, x2g)
    yi2 = jnp.minimum(y2, y2g)
    inter = jnp.maximum(xi2 - xi1, 0.0) * jnp.maximum(yi2 - yi1, 0.0)
    wp = x2 - x1
    hp = y2 - y1
    wg = x2g - x1g
    hg = y2g - y1g
    union = wp * hp + wg * hg - inter
    iou = inter * _rcp(union + eps)

    # ---- DIoU term: squared center distance / squared enclosing diagonal ----
    dex = jnp.maximum(x2, x2g) - jnp.minimum(x1, x1g)
    dey = jnp.maximum(y2, y2g) - jnp.minimum(y1, y1g)
    diag = dex * dex + dey * dey + eps
    dcx = 0.5 * ((x1 + x2) - (x1g + x2g))
    dcy = 0.5 * ((y1 + y2) - (y1g + y2g))
    cdist = dcx * dcx + dcy * dcy
    diou = 1.0 - iou + cdist * _rcp(diag)

    # ---- aspect-ratio consistency term (fused arctan difference) ----
    # atan(wg/hg) - atan(wp/hp) = atan((wg*hp - wp*hg) / (hg*hp + wg*wp))
    # (valid because both ratios are positive for valid boxes)
    num = wg * hp - wp * hg
    den = hg * hp + wg * wp
    d_atan = _atan(num * _rcp(den))
    v = (4.0 / (math.pi * math.pi)) * d_atan * d_atan
    # torch wraps alpha in no_grad(); forward value is identical.
    alpha = v * _rcp(1.0 - iou + v + eps)
    loss = diou + alpha * v

    # ---- accumulate partial sums into a resident (8,128) vector accumulator ----
    n_valid = n_ref[0]
    blk = c * pl.num_programs(1) + i
    needs_mask = (blk + 1) * (tr * 128) > n_valid

    @pl.when(jnp.logical_not(needs_mask))
    def _():
        out_ref[...] += loss.reshape(tr // 8, 8, 128).sum(axis=0)

    @pl.when(needs_mask)
    def _():
        ridx = jax.lax.broadcasted_iota(jnp.int32, (tr, 128), 0)
        lidx = jax.lax.broadcasted_iota(jnp.int32, (tr, 128), 1)
        gidx = (blk * tr + ridx) * 128 + lidx
        masked = jnp.where(gidx < n_valid, loss, 0.0)
        out_ref[...] += masked.reshape(tr // 8, 8, 128).sum(axis=0)


def ciou_loss(pred, target, *, eps=1e-7, max_rows_per_tile=1024, num_cores=2):
    """Complete-box-IoU loss, mean-reduced. pred/target: (N, 4) [x1,y1,x2,y2]."""
    n = pred.shape[0]
    assert pred.shape == (n, 4) and target.shape == (n, 4)
    if n == 0:
        return jnp.float32(jnp.nan)   # torch: mean over empty -> NaN

    # Lane-dense packing: (4, r_pad, 128); box index split over (sublane, lane).
    r_total = pl.cdiv(n, 128)
    # Adaptive tile rows: large enough to amortize per-step overhead, small
    # enough to fit scoped VMEM; multiple of 8 (sublane granularity).
    tr = min(max_rows_per_tile, ((pl.cdiv(r_total, num_cores) + 7) // 8) * 8)
    nblocks = pl.cdiv(r_total, tr)
    steps = pl.cdiv(nblocks, num_cores)
    r_pad = tr * steps * num_cores
    n_pad = r_pad * 128

    pad_box = jnp.array([0.0, 0.0, 1.0, 1.0], dtype=jnp.float32)  # benign box

    def prep(b):
        b = b.astype(jnp.float32)
        if n_pad > n:
            b = jnp.concatenate(
                [b, jnp.broadcast_to(pad_box, (n_pad - n, 4))], axis=0)
        return b.T.reshape(4, r_pad, 128)

    kernel = functools.partial(_ciou_kernel, tr=tr, eps=float(eps))
    partials = pl.pallas_call(
        kernel,
        out_shape=jax.ShapeDtypeStruct((num_cores, 8, 128), jnp.float32),
        grid_spec=pltpu.PrefetchScalarGridSpec(
            num_scalar_prefetch=1,
            grid=(num_cores, steps),
            in_specs=[
                pl.BlockSpec((4, tr, 128), lambda c, i, n_r: (0, c * steps + i, 0)),
                pl.BlockSpec((4, tr, 128), lambda c, i, n_r: (0, c * steps + i, 0)),
            ],
            out_specs=pl.BlockSpec((None, 8, 128), lambda c, i, n_r: (c, 0, 0)),
        ),
        compiler_params=pltpu.CompilerParams(
            # leading axis parallel -> both TensorCores on v7x;
            # trailing axis reduces into the resident output block.
            dimension_semantics=("parallel", "arbitrary"),
            vmem_limit_bytes=32 * 1024 * 1024,
        ),
    )(jnp.asarray([n], dtype=jnp.int32), prep(pred), prep(target))

    # Final cross-lane/sublane reduce + mean on the tiny partials in XLA.
    return partials.sum() / n


def _ciou_ref(pred, target, eps=1e-7):
    """Pure-JAX reference (same math as torchvision.ops.complete_box_iou_loss)."""
    x1, y1, x2, y2 = (pred[:, k] for k in range(4))
    x1g, y1g, x2g, y2g = (target[:, k] for k in range(4))
    xi1 = jnp.maximum(x1, x1g); yi1 = jnp.maximum(y1, y1g)
    xi2 = jnp.minimum(x2, x2g); yi2 = jnp.minimum(y2, y2g)
    inter = jnp.where((xi2 > xi1) & (yi2 > yi1), (xi2 - xi1) * (yi2 - yi1), 0.0)
    union = (x2 - x1) * (y2 - y1) + (x2g - x1g) * (y2g - y1g) - inter
    iou = inter / (union + eps)
    xc1 = jnp.minimum(x1, x1g); yc1 = jnp.minimum(y1, y1g)
    xc2 = jnp.maximum(x2, x2g); yc2 = jnp.maximum(y2, y2g)
    diag = (xc2 - xc1) ** 2 + (yc2 - yc1) ** 2 + eps
    cdist = ((x1 + x2) / 2 - (x1g + x2g) / 2) ** 2 + ((y1 + y2) / 2 - (y1g + y2g) / 2) ** 2
    diou = 1.0 - iou + cdist / diag
    v = (4.0 / (jnp.pi ** 2)) * (jnp.arctan((x2g - x1g) / (y2g - y1g))
                                 - jnp.arctan((x2 - x1) / (y2 - y1))) ** 2
    alpha = v / (1.0 - iou + v + eps)
    return jnp.mean(diou + alpha * v)


if __name__ == "__main__":
    key = jax.random.PRNGKey(0)
    for N in (8, 777):   # small; 777 exercises padding + both grid cores
        k1, k2, k3, k4 = jax.random.split(jax.random.fold_in(key, N), 4)
        xy_p = jax.random.uniform(k1, (N, 2), minval=0.0, maxval=10.0)
        wh_p = jax.random.uniform(k2, (N, 2), minval=0.5, maxval=5.0)
        xy_t = jax.random.uniform(k3, (N, 2), minval=0.0, maxval=10.0)
        wh_t = jax.random.uniform(k4, (N, 2), minval=0.5, maxval=5.0)
        pred = jnp.concatenate([xy_p, xy_p + wh_p], axis=1).astype(jnp.float32)
        tgt = jnp.concatenate([xy_t, xy_t + wh_t], axis=1).astype(jnp.float32)

        loss = ciou_loss(pred, tgt)
        jax.block_until_ready(loss)

        ref = _ciou_ref(pred, tgt)
        assert jnp.allclose(loss, ref, rtol=1e-4, atol=1e-5), (N, loss, ref)

    print("KERNEL_OK")
</pallas_src>

<mosaic_0001>
module attributes {stable_mosaic.version = 11 : i64} {
  func.func @_ciou_kernel(%arg0: i32, %arg1: i32, %arg2: memref<1xi32, #tpu.memory_space<smem>>, %arg3: memref<4x8x128xf32, #tpu.memory_space<vmem>>, %arg4: memref<4x8x128xf32, #tpu.memory_space<vmem>>, %arg5: memref<1x8x128xf32, #tpu.memory_space<vmem>>) attributes {dimension_semantics = [#tpu.dimension_semantics<parallel>, #tpu.dimension_semantics<arbitrary>], iteration_bounds = array<i64: 2, 1>, scalar_prefetch = 1 : i64, scratch_operands = 0 : i64, tpu.core_type = #tpu.core_type<tc>, window_params = [{transform_indices = @transform_0, window_bounds = array<i64: 4, 8, 128>}, {transform_indices = @transform_1, window_bounds = array<i64: 4, 8, 128>}, {transform_indices = @transform_2, window_bounds = array<i64: 1, 8, 128>}]} {
    %c0_i32 = arith.constant 0 : i32
    %0 = arith.cmpi eq, %arg1, %c0_i32 : i32
    %1 = arith.extui %0 : i1 to i32
    %c0_i32_0 = arith.constant 0 : i32
    %2 = arith.cmpi ne, %1, %c0_i32_0 : i32
    scf.if %2 {
      %cst_55 = arith.constant 0.000000e+00 : f32
      %172 = vector.broadcast %cst_55 : f32 to vector<8x128xf32>
      %c0_56 = arith.constant 0 : index
      %c0_57 = arith.constant 0 : index
      %c0_58 = arith.constant 0 : index
      %173 = vector.load %arg5[%c0_56, %c0_57, %c0_58] : memref<1x8x128xf32, #tpu.memory_space<vmem>>, vector<1x8x128xf32>
      %174 = vector.shape_cast %173 : vector<1x8x128xf32> to vector<8x128xf32>
      %175 = vector.shape_cast %172 : vector<8x128xf32> to vector<1x8x128xf32>
      tpu.vector_store %arg5[%c0_56, %c0_57, %c0_58], %175 {strides = array<i32>} : memref<1x8x128xf32, #tpu.memory_space<vmem>>, vector<1x8x128xf32>,
    } else {
    }
    %c0 = arith.constant 0 : index
    %c0_1 = arith.constant 0 : index
    %c0_2 = arith.constant 0 : index
    %3 = vector.load %arg3[%c0, %c0_1, %c0_2] : memref<4x8x128xf32, #tpu.memory_space<vmem>>, vector<1x8x128xf32>
    %4 = vector.shape_cast %3 : vector<1x8x128xf32> to vector<8x128xf32>
    %c1 = arith.constant 1 : index
    %c0_3 = arith.constant 0 : index
    %c0_4 = arith.constant 0 : index
    %5 = vector.load %arg3[%c1, %c0_3, %c0_4] : memref<4x8x128xf32, #tpu.memory_space<vmem>>, vector<1x8x128xf32>
    %6 = vector.shape_cast %5 : vector<1x8x128xf32> to vector<8x128xf32>
    %c2 = arith.constant 2 : index
    %c0_5 = arith.constant 0 : index
    %c0_6 = arith.constant 0 : index
    %7 = vector.load %arg3[%c2, %c0_5, %c0_6] : memref<4x8x128xf32, #tpu.memory_space<vmem>>, vector<1x8x128xf32>
    %8 = vector.shape_cast %7 : vector<1x8x128xf32> to vector<8x128xf32>
    %c3 = arith.constant 3 : index
    %c0_7 = arith.constant 0 : index
    %c0_8 = arith.constant 0 : index
    %9 = vector.load %arg3[%c3, %c0_7, %c0_8] : memref<4x8x128xf32, #tpu.memory_space<vmem>>, vector<1x8x128xf32>
    %10 = vector.shape_cast %9 : vector<1x8x128xf32> to vector<8x128xf32>
    %c0_9 = arith.constant 0 : index
    %c0_10 = arith.constant 0 : index
    %c0_11 = arith.constant 0 : index
    %11 = vector.load %arg4[%c0_9, %c0_10, %c0_11] : memref<4x8x128xf32, #tpu.memory_space<vmem>>, vector<1x8x128xf32>
    %12 = vector.shape_cast %11 : vector<1x8x128xf32> to vector<8x128xf32>
    %c1_12 = arith.constant 1 : index
    %c0_13 = arith.constant 0 : index
    %c0_14 = arith.constant 0 : index
    %13 = vector.load %arg4[%c1_12, %c0_13, %c0_14] : memref<4x8x128xf32, #tpu.memory_space<vmem>>, vector<1x8x128xf32>
    %14 = vector.shape_cast %13 : vector<1x8x128xf32> to vector<8x128xf32>
    %c2_15 = arith.constant 2 : index
    %c0_16 = arith.constant 0 : index
    %c0_17 = arith.constant 0 : index
    %15 = vector.load %arg4[%c2_15, %c0_16, %c0_17] : memref<4x8x128xf32, #tpu.memory_space<vmem>>, vector<1x8x128xf32>
    %16 = vector.shape_cast %15 : vector<1x8x128xf32> to vector<8x128xf32>
    %c3_18 = arith.constant 3 : index
    %c0_19 = arith.constant 0 : index
    %c0_20 = arith.constant 0 : index
    %17 = vector.load %arg4[%c3_18, %c0_19, %c0_20] : memref<4x8x128xf32, #tpu.memory_space<vmem>>, vector<1x8x128xf32>
    %18 = vector.shape_cast %17 : vector<1x8x128xf32> to vector<8x128xf32>
    %19 = arith.maximumf %4, %12 : vector<8x128xf32>
    %20 = arith.maximumf %6, %14 : vector<8x128xf32>
    %21 = arith.minimumf %8, %16 : vector<8x128xf32>
    %22 = arith.minimumf %10, %18 : vector<8x128xf32>
    %23 = arith.subf %21, %19 : vector<8x128xf32>
    %cst = arith.constant 0.000000e+00 : f32
    %24 = vector.broadcast %cst : f32 to vector<8x128xf32>
    %25 = arith.maximumf %23, %24 : vector<8x128xf32>
    %26 = arith.subf %22, %20 : vector<8x128xf32>
    %cst_21 = arith.constant 0.000000e+00 : f32
    %27 = vector.broadcast %cst_21 : f32 to vector<8x128xf32>
    %28 = arith.maximumf %26, %27 : vector<8x128xf32>
    %29 = arith.mulf %25, %28 : vector<8x128xf32>
    %30 = arith.subf %8, %4 : vector<8x128xf32>
    %31 = arith.subf %10, %6 : vector<8x128xf32>
    %32 = arith.subf %16, %12 : vector<8x128xf32>
    %33 = arith.subf %18, %14 : vector<8x128xf32>
    %34 = arith.mulf %30, %31 : vector<8x128xf32>
    %35 = arith.mulf %32, %33 : vector<8x128xf32>
    %36 = arith.addf %34, %35 : vector<8x128xf32>
    %37 = arith.subf %36, %29 : vector<8x128xf32>
    %cst_22 = arith.constant 1.000000e-07 : f32
    %38 = vector.broadcast %cst_22 : f32 to vector<8x128xf32>
    %39 = arith.addf %37, %38 : vector<8x128xf32>
    %40 = tpu.reciprocal %39 {approx = true} : vector<8x128xf32> -> vector<8x128xf32>
    %41 = arith.mulf %39, %40 : vector<8x128xf32>
    %cst_23 = arith.constant 2.000000e+00 : f32
    %42 = vector.broadcast %cst_23 : f32 to vector<8x128xf32>
    %43 = arith.subf %42, %41 : vector<8x128xf32>
    %44 = arith.mulf %40, %43 : vector<8x128xf32>
    %45 = arith.mulf %29, %44 : vector<8x128xf32>
    %46 = arith.maximumf %8, %16 : vector<8x128xf32>
    %47 = arith.minimumf %4, %12 : vector<8x128xf32>
    %48 = arith.subf %46, %47 : vector<8x128xf32>
    %49 = arith.maximumf %10, %18 : vector<8x128xf32>
    %50 = arith.minimumf %6, %14 : vector<8x128xf32>
    %51 = arith.subf %49, %50 : vector<8x128xf32>
    %52 = arith.mulf %48, %48 : vector<8x128xf32>
    %53 = arith.mulf %51, %51 : vector<8x128xf32>
    %54 = arith.addf %52, %53 : vector<8x128xf32>
    %cst_24 = arith.constant 1.000000e-07 : f32
    %55 = vector.broadcast %cst_24 : f32 to vector<8x128xf32>
    %56 = arith.addf %54, %55 : vector<8x128xf32>
    %57 = arith.addf %4, %8 : vector<8x128xf32>
    %58 = arith.addf %12, %16 : vector<8x128xf32>
    %59 = arith.subf %57, %58 : vector<8x128xf32>
    %cst_25 = arith.constant 5.000000e-01 : f32
    %60 = vector.broadcast %cst_25 : f32 to vector<8x128xf32>
    %61 = arith.mulf %60, %59 : vector<8x128xf32>
    %62 = arith.addf %6, %10 : vector<8x128xf32>
    %63 = arith.addf %14, %18 : vector<8x128xf32>
    %64 = arith.subf %62, %63 : vector<8x128xf32>
    %cst_26 = arith.constant 5.000000e-01 : f32
    %65 = vector.broadcast %cst_26 : f32 to vector<8x128xf32>
    %66 = arith.mulf %65, %64 : vector<8x128xf32>
    %67 = arith.mulf %61, %61 : vector<8x128xf32>
    %68 = arith.mulf %66, %66 : vector<8x128xf32>
    %69 = arith.addf %67, %68 : vector<8x128xf32>
    %cst_27 = arith.constant 1.000000e+00 : f32
    %70 = vector.broadcast %cst_27 : f32 to vector<8x128xf32>
    %71 = arith.subf %70, %45 : vector<8x128xf32>
    %72 = tpu.reciprocal %56 {approx = true} : vector<8x128xf32> -> vector<8x128xf32>
    %73 = arith.mulf %56, %72 : vector<8x128xf32>
    %cst_28 = arith.constant 2.000000e+00 : f32
    %74 = vector.broadcast %cst_28 : f32 to vector<8x128xf32>
    %75 = arith.subf %74, %73 : vector<8x128xf32>
    %76 = arith.mulf %72, %75 : vector<8x128xf32>
    %77 = arith.mulf %69, %76 : vector<8x128xf32>
    %78 = arith.addf %71, %77 : vector<8x128xf32>
    %79 = arith.mulf %32, %31 : vector<8x128xf32>
    %80 = arith.mulf %30, %33 : vector<8x128xf32>
    %81 = arith.subf %79, %80 : vector<8x128xf32>
    %82 = arith.mulf %33, %31 : vector<8x128xf32>
    %83 = arith.mulf %32, %30 : vector<8x128xf32>
    %84 = arith.addf %82, %83 : vector<8x128xf32>
    %85 = tpu.reciprocal %84 {approx = true} : vector<8x128xf32> -> vector<8x128xf32>
    %86 = arith.mulf %84, %85 : vector<8x128xf32>
    %cst_29 = arith.constant 2.000000e+00 : f32
    %87 = vector.broadcast %cst_29 : f32 to vector<8x128xf32>
    %88 = arith.subf %87, %86 : vector<8x128xf32>
    %89 = arith.mulf %85, %88 : vector<8x128xf32>
    %90 = arith.mulf %81, %89 : vector<8x128xf32>
    %91 = math.absf %90 : vector<8x128xf32>
    %cst_30 = arith.constant 1.000000e+00 : f32
    %92 = vector.broadcast %cst_30 : f32 to vector<8x128xf32>
    %93 = arith.cmpf ogt, %91, %92 : vector<8x128xf32>
    %94 = tpu.reciprocal %91 {approx = true} : vector<8x128xf32> -> vector<8x128xf32>
    %95 = arith.mulf %91, %94 : vector<8x128xf32>
    %cst_31 = arith.constant 2.000000e+00 : f32
    %96 = vector.broadcast %cst_31 : f32 to vector<8x128xf32>
    %97 = arith.subf %96, %95 : vector<8x128xf32>
    %98 = arith.mulf %94, %97 : vector<8x128xf32>
    %99 = arith.select %93, %98, %91 : vector<8x128xi1>, vector<8x128xf32>
    %cst_32 = arith.constant 0.414213568 : f32
    %100 = vector.broadcast %cst_32 : f32 to vector<8x128xf32>
    %101 = arith.cmpf ogt, %99, %100 : vector<8x128xf32>
    %cst_33 = arith.constant 1.000000e+00 : f32
    %102 = vector.broadcast %cst_33 : f32 to vector<8x128xf32>
    %103 = arith.subf %99, %102 : vector<8x128xf32>
    %cst_34 = arith.constant 1.000000e+00 : f32
    %104 = vector.broadcast %cst_34 : f32 to vector<8x128xf32>
    %105 = arith.addf %99, %104 : vector<8x128xf32>
    %106 = tpu.reciprocal %105 {approx = true} : vector<8x128xf32> -> vector<8x128xf32>
    %107 = arith.mulf %105, %106 : vector<8x128xf32>
    %cst_35 = arith.constant 2.000000e+00 : f32
    %108 = vector.broadcast %cst_35 : f32 to vector<8x128xf32>
    %109 = arith.subf %108, %107 : vector<8x128xf32>
    %110 = arith.mulf %106, %109 : vector<8x128xf32>
    %111 = arith.mulf %103, %110 : vector<8x128xf32>
    %112 = arith.select %101, %111, %99 : vector<8x128xi1>, vector<8x128xf32>
    %113 = arith.mulf %112, %112 : vector<8x128xf32>
    %cst_36 = arith.constant 0.0769230798 : f32
    %114 = vector.broadcast %cst_36 : f32 to vector<8x128xf32>
    %115 = arith.mulf %113, %114 : vector<8x128xf32>
    %cst_37 = arith.constant -0.0909090936 : f32
    %116 = vector.broadcast %cst_37 : f32 to vector<8x128xf32>
    %117 = arith.addf %116, %115 : vector<8x128xf32>
    %118 = arith.mulf %113, %117 : vector<8x128xf32>
    %cst_38 = arith.constant 0.111111112 : f32
    %119 = vector.broadcast %cst_38 : f32 to vector<8x128xf32>
    %120 = arith.addf %119, %118 : vector<8x128xf32>
    %121 = arith.mulf %113, %120 : vector<8x128xf32>
    %cst_39 = arith.constant -0.142857149 : f32
    %122 = vector.broadcast %cst_39 : f32 to vector<8x128xf32>
    %123 = arith.addf %122, %121 : vector<8x128xf32>
    %124 = arith.mulf %113, %123 : vector<8x128xf32>
    %cst_40 = arith.constant 2.000000e-01 : f32
    %125 = vector.broadcast %cst_40 : f32 to vector<8x128xf32>
    %126 = arith.addf %125, %124 : vector<8x128xf32>
    %127 = arith.mulf %113, %126 : vector<8x128xf32>
    %cst_41 = arith.constant -0.333333343 : f32
    %128 = vector.broadcast %cst_41 : f32 to vector<8x128xf32>
    %129 = arith.addf %128, %127 : vector<8x128xf32>
    %130 = arith.mulf %113, %129 : vector<8x128xf32>
    %cst_42 = arith.constant 1.000000e+00 : f32
    %131 = vector.broadcast %cst_42 : f32 to vector<8x128xf32>
    %132 = arith.addf %131, %130 : vector<8x128xf32>
    %133 = arith.mulf %112, %132 : vector<8x128xf32>
    %cst_43 = arith.constant 0.785398185 : f32
    %134 = vector.broadcast %cst_43 : f32 to vector<8x128xf32>
    %135 = arith.addf %134, %133 : vector<8x128xf32>
    %136 = arith.select %101, %135, %133 : vector<8x128xi1>, vector<8x128xf32>
    %cst_44 = arith.constant 1.57079637 : f32
    %137 = vector.broadcast %cst_44 : f32 to vector<8x128xf32>
    %138 = arith.subf %137, %136 : vector<8x128xf32>
    %139 = arith.select %93, %138, %136 : vector<8x128xi1>, vector<8x128xf32>
    %cst_45 = arith.constant 0.000000e+00 : f32
    %140 = vector.broadcast %cst_45 : f32 to vector<8x128xf32>
    %141 = arith.cmpf olt, %90, %140 : vector<8x128xf32>
    %cst_46 = arith.constant 0.000000e+00 : f32
    %142 = vector.broadcast %cst_46 : f32 to vector<8x128xf32>
    %143 = arith.subf %142, %139 : vector<8x128xf32>
    %144 = arith.select %141, %143, %139 : vector<8x128xi1>, vector<8x128xf32>
    %cst_47 = arith.constant 0.405284733 : f32
    %145 = vector.broadcast %cst_47 : f32 to vector<8x128xf32>
    %146 = arith.mulf %145, %144 : vector<8x128xf32>
    %147 = arith.mulf %146, %144 : vector<8x128xf32>
    %cst_48 = arith.constant 1.000000e+00 : f32
    %148 = vector.broadcast %cst_48 : f32 to vector<8x128xf32>
    %149 = arith.subf %148, %45 : vector<8x128xf32>
    %150 = arith.addf %149, %147 : vector<8x128xf32>
    %cst_49 = arith.constant 1.000000e-07 : f32
    %151 = vector.broadcast %cst_49 : f32 to vector<8x128xf32>
    %152 = arith.addf %150, %151 : vector<8x128xf32>
    %153 = tpu.reciprocal %152 {approx = true} : vector<8x128xf32> -> vector<8x128xf32>
    %154 = arith.mulf %152, %153 : vector<8x128xf32>
    %cst_50 = arith.constant 2.000000e+00 : f32
    %155 = vector.broadcast %cst_50 : f32 to vector<8x128xf32>
    %156 = arith.subf %155, %154 : vector<8x128xf32>
    %157 = arith.mulf %153, %156 : vector<8x128xf32>
    %158 = arith.mulf %147, %157 : vector<8x128xf32>
    %159 = arith.mulf %158, %147 : vector<8x128xf32>
    %160 = arith.addf %78, %159 : vector<8x128xf32>
    %c0_51 = arith.constant 0 : index
    %161 = memref.load %arg2[%c0_51] : memref<1xi32, #tpu.memory_space<smem>>
    %c1_i32 = arith.constant 1 : i32
    %162 = arith.muli %arg0, %c1_i32 : i32
    %163 = arith.addi %162, %arg1 : i32
    %c1_i32_52 = arith.constant 1 : i32
    %164 = arith.addi %163, %c1_i32_52 : i32
    %c1024_i32 = arith.constant 1024 : i32
    %165 = arith.muli %164, %c1024_i32 : i32
    %166 = arith.cmpi sgt, %165, %161 : i32
    %true = arith.constant true
    %167 = arith.xori %166, %true : i1
    %168 = arith.extui %167 : i1 to i32
    %c0_i32_53 = arith.constant 0 : i32
    %169 = arith.cmpi ne, %168, %c0_i32_53 : i32
    scf.if %169 {
      %c0_55 = arith.constant 0 : index
      %c0_56 = arith.constant 0 : index
      %c0_57 = arith.constant 0 : index
      %172 = vector.load %arg5[%c0_55, %c0_56, %c0_57] : memref<1x8x128xf32, #tpu.memory_space<vmem>>, vector<1x8x128xf32>
      %173 = vector.shape_cast %172 : vector<1x8x128xf32> to vector<8x128xf32>
      %174 = vector.shape_cast %160 : vector<8x128xf32> to vector<1x8x128xf32>
      %cst_58 = arith.constant dense<0.000000e+00> : vector<8x128xf32>
      %175 = vector.multi_reduction <add>, %174, %cst_58 [0] : vector<1x8x128xf32> to vector<8x128xf32>
      %176 = arith.addf %173, %175 : vector<8x128xf32>
      %c0_59 = arith.constant 0 : index
      %c0_60 = arith.constant 0 : index
      %c0_61 = arith.constant 0 : index
      %177 = vector.load %arg5[%c0_59, %c0_60, %c0_61] : memref<1x8x128xf32, #tpu.memory_space<vmem>>, vector<1x8x128xf32>
      %178 = vector.shape_cast %177 : vector<1x8x128xf32> to vector<8x128xf32>
      %179 = vector.shape_cast %176 : vector<8x128xf32> to vector<1x8x128xf32>
      tpu.vector_store %arg5[%c0_59, %c0_60, %c0_61], %179 {strides = array<i32>} : memref<1x8x128xf32, #tpu.memory_space<vmem>>, vector<1x8x128xf32>,
    } else {
    }
    %170 = arith.extui %166 : i1 to i32
    %c0_i32_54 = arith.constant 0 : i32
    %171 = arith.cmpi ne, %170, %c0_i32_54 : i32
    scf.if %171 {
      %172 = tpu.iota {dimensions = array<i32: 0>} : vector<8x128xi32>
      %173 = tpu.iota {dimensions = array<i32: 1>} : vector<8x128xi32>
      %c8_i32 = arith.constant 8 : i32
      %174 = arith.muli %163, %c8_i32 : i32
      %175 = vector.broadcast %174 : i32 to vector<8x128xi32>
      %176 = arith.addi %175, %172 : vector<8x128xi32>
      %c128_i32 = arith.constant 128 : i32
      %177 = vector.broadcast %c128_i32 : i32 to vector<8x128xi32>
      %178 = arith.muli %176, %177 : vector<8x128xi32>
      %179 = arith.addi %178, %173 : vector<8x128xi32>
      %180 = vector.broadcast %161 : i32 to vector<8x128xi32>
      %181 = arith.cmpi slt, %179, %180 : vector<8x128xi32>
      %cst_55 = arith.constant 0.000000e+00 : f32
      %182 = vector.broadcast %cst_55 : f32 to vector<8x128xf32>
      %183 = arith.select %181, %160, %182 : vector<8x128xi1>, vector<8x128xf32>
      %c0_56 = arith.constant 0 : index
      %c0_57 = arith.constant 0 : index
      %c0_58 = arith.constant 0 : index
      %184 = vector.load %arg5[%c0_56, %c0_57, %c0_58] : memref<1x8x128xf32, #tpu.memory_space<vmem>>, vector<1x8x128xf32>
      %185 = vector.shape_cast %184 : vector<1x8x128xf32> to vector<8x128xf32>
      %186 = vector.shape_cast %183 : vector<8x128xf32> to vector<1x8x128xf32>
      %cst_59 = arith.constant dense<0.000000e+00> : vector<8x128xf32>
      %187 = vector.multi_reduction <add>, %186, %cst_59 [0] : vector<1x8x128xf32> to vector<8x128xf32>
      %188 = arith.addf %185, %187 : vector<8x128xf32>
      %c0_60 = arith.constant 0 : index
      %c0_61 = arith.constant 0 : index
      %c0_62 = arith.constant 0 : index
      %189 = vector.load %arg5[%c0_60, %c0_61, %c0_62] : memref<1x8x128xf32, #tpu.memory_space<vmem>>, vector<1x8x128xf32>
      %190 = vector.shape_cast %189 : vector<1x8x128xf32> to vector<8x128xf32>
      %191 = vector.shape_cast %188 : vector<8x128xf32> to vector<1x8x128xf32>
      tpu.vector_store %arg5[%c0_60, %c0_61, %c0_62], %191 {strides = array<i32>} : memref<1x8x128xf32, #tpu.memory_space<vmem>>, vector<1x8x128xf32>,
    } else {
    }
    return
  }
  func.func @transform_0(%arg0: i32, %arg1: i32, %arg2: memref<1xi32, #tpu.memory_space<smem>>) -> (i32, i32, i32) {
    %c1_i32 = arith.constant 1 : i32
    %0 = arith.muli %arg0, %c1_i32 : i32
    %1 = arith.addi %0, %arg1 : i32
    %c0_i32 = arith.constant 0 : i32
    %c0_i32_0 = arith.constant 0 : i32
    %c0_i32_1 = arith.constant 0 : i32
    return %c0_i32, %1, %c0_i32_0 : i32, i32, i32
  }
  func.func @transform_1(%arg0: i32, %arg1: i32, %arg2: memref<1xi32, #tpu.memory_space<smem>>) -> (i32, i32, i32) {
    %c1_i32 = arith.constant 1 : i32
    %0 = arith.muli %arg0, %c1_i32 : i32
    %1 = arith.addi %0, %arg1 : i32
    %c0_i32 = arith.constant 0 : i32
    %c0_i32_0 = arith.constant 0 : i32
    %c0_i32_1 = arith.constant 0 : i32
    return %c0_i32, %1, %c0_i32_0 : i32, i32, i32
  }
  func.func @transform_2(%arg0: i32, %arg1: i32, %arg2: memref<1xi32, #tpu.memory_space<smem>>) -> (i32, i32, i32) {
    %c0_i32 = arith.constant 0 : i32
    %c0_i32_0 = arith.constant 0 : i32
    %c0_i32_1 = arith.constant 0 : i32
    return %arg0, %c0_i32, %c0_i32_0 : i32, i32, i32
  }
}

</mosaic_0001>

<llo_original>
// kernel: tpu_custom_call.1
$region0: #{tpu_custom_call.1}
  #allocation0 [shape = 'u32[]', space=smem, size = 0x4, offset = 0x4, fixed_abs, tag = 'smem constant byte address 0x4 - core index']
  #allocation1 [shape = 'u32[144,128]{1,0:T(1,128)}', space=vmem, size = 0x12000, scoped, tag = 'internal scratch']
  #allocation2 [shape = 's32[1]{0}', space=sflag, size = 0x4, scoped, tag = 'scoped memory for tpu_custom_call.1']
  #allocation3 [shape = 's32[1]{0:T(128)S(6)}', space=smem, size = 0x200, scoped, tag = 'prefetched SMEM operand 0']
  %s0 = inlined_call_operand.<no memory space> [shape: s32[1], index: 0, kind: input, shape index: {}]
  %s1 = inlined_call_operand.hbm [shape: f32[4,16,128], index: 1, kind: input, shape index: {}]
  %s2 = inlined_call_operand.hbm [shape: f32[4,16,128], index: 2, kind: input, shape index: {}]
  %s3 = inlined_call_operand.hbm [shape: f32[2,8,128], index: 3, kind: output, shape index: {}]
  %s4 = sld [smem:[#allocation0]]
  $region61: #{tpu_custom_call.1} parent=0
    _
  %s6 = ssub.s32 1, %s4
  %s7 = scalar_select 0, %s6, %s4
  %8 = sst [smem:[#allocation3]] %s0
  $region1: #{tpu_custom_call.1} parent=0
    #allocation4 [shape = 'u8[32768]{0}', space=vmem, size = 0x8000, scoped, tag = 'input window, operand 1']
    #allocation5 [shape = 's32[2]{0}', space=sflag, size = 0x8, scoped, tag = 'scoped memory for tpu_custom_call.1']
    #allocation6 [shape = 's32[2]{0}', space=sflag, size = 0x8, scoped, tag = 'scoped memory for tpu_custom_call.1']
    #allocation7 [shape = 'u8[32768]{0}', space=vmem, size = 0x8000, scoped, tag = 'input window, operand 2']
    #allocation8 [shape = 's32[2]{0}', space=sflag, size = 0x8, scoped, tag = 'scoped memory for tpu_custom_call.1']
    #allocation9 [shape = 'u8[8192]{0}', space=vmem, size = 0x2000, scoped, tag = 'output window, operand 0']
    %9 = vsyncpa [#allocation5], 0
    %s10 = scalar_lea.sflag [#allocation5], 1
    %11 = vsyncpa %s10, 0
    %12 = vsyncpa [#allocation8], 0
    %s13 = scalar_lea.sflag [#allocation8], 1
    %14 = vsyncpa %s13, 0
    %15 = vsyncpa [#allocation6], 0
    %s16 = scalar_lea.sflag [#allocation6], 1
    %17 = vsyncpa %s16, 0
    loop: start=0, step=1, limit=4
    $region2: #{tpu_custom_call.1} parent=1 // loop_pre_header
      _
    $region3: #{tpu_custom_call.1} parent=1 // loop_header
      %s19 = sphi 0, %s23
      %p20 = scmp.ge.s32.totalorder %s19, 4
      %s26 = sphi 0, %s38
      %s27 = sphi 0, %s34
      %s28 = sphi 0, %s26
      %s29 = sphi 0, %s27
      %s30 = sphi 0, %s28
      %s31 = sphi 0, %s29
      %s43 = sphi 0, %s45
      %s46 = sphi 0, %s43
      %s47 = sphi 0, %s46
      %s63 = sphi 0, %s47
      %s71 = sphi 0, %s73
      %s74 = sphi 0, %s71
      %s75 = sphi 0, %s74
      %s91 = sphi 0, %s75
      %s97 = sphi 0, %s99
      %s100 = sphi 0, %s97
      %s101 = sphi 0, %s100
      %s117 = sphi 0, %s101
    $region4: #{tpu_custom_call.1} parent=1 // loop_header_branch
      %22 = sbr.rel (%p20) target = $region8
    $region5: #{tpu_custom_call.1} parent=1 // loop_body
      %s24 = ssub.s32 %s19, 1
      %s25 = ssub.s32 %s19, 2
      %s32 = sadd.s32 1, %s27
      %p33 = scmp.ge.s32.totalorder %s32, 1
      %s34 = scalar_select %p33, 0, %s32
      %s35 = sadd.s32 1, %s26
      %s36 = scalar_select %p33, %s35, %s26
      %p37 = scmp.ge.s32.totalorder %s36, 2
      %s38 = scalar_select %p37, 0, %s36
      %s39 = sadd.s32 %s26, %s27
      %s40 = sadd.s32 %s38, %s34
      %s41 = ssub.s32 %s39, %s40
      %p42 = scmp.eq.s32.totalorder %s41, 0
      %s44 = sadd.s32 %s43, 1
      %s45 = scalar_select %p42, %s43, %s44
      %p48 = pneg %p42
      %p49 = scmp.eq.s32.totalorder %s19, 1
      %p50 = por %p48, %p49
      %p51 = scmp.ne.s32.totalorder %s43, %s46
      %p52 = scmp.eq.s32.totalorder %s19, 0
      %p53 = por %p51, %p52
      %p54 = scmp.ne.s32.totalorder %s43, %s46
      %p55 = scmp.eq.s32.totalorder %s24, 1
      %p56 = por %p54, %p55
      %p57 = scmp.ne.s32.totalorder %s46, %s47
      %p58 = scmp.eq.s32.totalorder %s24, 0
      %p59 = por %p57, %p58
      %p60 = scmp.ne.s32.totalorder %s46, %s47
      %p61 = scmp.eq.s32.totalorder %s25, 1
      %p62 = por %p60, %p61
      %p64 = scmp.ne.s32.totalorder %s47, %s63
      %p65 = scmp.eq.s32.totalorder %s25, 0
      %p66 = por %p64, %p65
      %s67 = sadd.s32 %s26, %s27
      %s68 = sadd.s32 %s38, %s34
      %s69 = ssub.s32 %s67, %s68
      %p70 = scmp.eq.s32.totalorder %s69, 0
      %s72 = sadd.s32 %s71, 1
      %s73 = scalar_select %p70, %s71, %s72
      %p76 = pneg %p70
      %p77 = scmp.eq.s32.totalorder %s19, 1
      %p78 = por %p76, %p77
      %p79 = scmp.ne.s32.totalorder %s71, %s74
      %p80 = scmp.eq.s32.totalorder %s19, 0
      %p81 = por %p79, %p80
      %p82 = scmp.ne.s32.totalorder %s71, %s74
      %p83 = scmp.eq.s32.totalorder %s24, 1
      %p84 = por %p82, %p83
      %p85 = scmp.ne.s32.totalorder %s74, %s75
      %p86 = scmp.eq.s32.totalorder %s24, 0
      %p87 = por %p85, %p86
      %p88 = scmp.ne.s32.totalorder %s74, %s75
      %p89 = scmp.eq.s32.totalorder %s25, 1
      %p90 = por %p88, %p89
      %p92 = scmp.ne.s32.totalorder %s75, %s91
      %p93 = scmp.eq.s32.totalorder %s25, 0
      %p94 = por %p92, %p93
      %s95 = ssub.s32 %s26, %s38
      %p96 = scmp.eq.s32.totalorder %s95, 0
      %s98 = sadd.s32 %s97, 1
      %s99 = scalar_select %p96, %s97, %s98
      %p102 = pneg %p96
      %p103 = scmp.eq.s32.totalorder %s19, 1
      %p104 = por %p102, %p103
      %p105 = scmp.ne.s32.totalorder %s97, %s100
      %p106 = scmp.eq.s32.totalorder %s19, 0
      %p107 = por %p105, %p106
      %p108 = scmp.ne.s32.totalorder %s97, %s100
      %p109 = scmp.eq.s32.totalorder %s24, 1
      %p110 = por %p108, %p109
      %p111 = scmp.ne.s32.totalorder %s100, %s101
      %p112 = scmp.eq.s32.totalorder %s24, 0
      %p113 = por %p111, %p112
      %p114 = scmp.ne.s32.totalorder %s100, %s101
      %p115 = scmp.eq.s32.totalorder %s25, 1
      %p116 = por %p114, %p115
      %p118 = scmp.ne.s32.totalorder %s101, %s117
      %p119 = scmp.eq.s32.totalorder %s25, 0
      %p120 = por %p118, %p119
      %p121 = scmp.le.s32.totalorder 1, %s19
      %p122 = scmp.lt.s32.totalorder %s19, 3
      %p123 = pnand %p121, %p122
      %p124 = pneg %p123
      // Predicated region
      $region9: #{tpu_custom_call.1} parent=5 // pred_check
        _
      $region10: #{tpu_custom_call.1} parent=5 // pred_check_branch
        %126 = sbr.rel (%p123) target = $region12
      $region11: #{tpu_custom_call.1} parent=5 // pred_region
        %s127 = ssub.s32 %s19, 1
      $region12: #{tpu_custom_call.1} parent=5 // pred_fallthru
        _
      %p128 = scmp.lt.s32.totalorder %s19, 2
      // Predicated region
      $region13: #{tpu_custom_call.1} parent=5 // pred_check
        %p129 = pneg %p128
      $region14: #{tpu_custom_call.1} parent=5 // pred_check_branch
        %131 = sbr.rel (%p129) target = $region16
      $region15: #{tpu_custom_call.1} parent=5 // pred_region
        // Predicated region
        $region17: #{tpu_custom_call.1} parent=15 // pred_check
          %p132 = pneg %p53
        $region18: #{tpu_custom_call.1} parent=15 // pred_check_branch
          %134 = sbr.rel (%p132) target = $region20
        $region19: #{tpu_custom_call.1} parent=15 // pred_region
          %s135 = sand.u32 %s43, 1
          %s136 = scalar_lea.sflag [#allocation5], %s135
          %s137 = sand.u32 %s43, 1
          %s138 = smul.addr %s137, 32
          %s139 = scalar_lea.vmem [#allocation4], %s138
          %s140 = sadd.s32 %s26, %s27
          %s142 = ssub.s32 512, 512
          %143 = vsyncadd %s136, %s142
          %s144 = smul.addr %s140, 128
          %s145 = scalar_lea.hbm %s1, %s144
          %s146 = sshll.u32 %s139, 4
          %s147 = int_to_ptr.vmem [resolvable:$true] %s146
          %152 = dma.hbm_to_vmem [thread:$0]  %s145, 512, %s147, %s136, 256, 128, 8
        $region20: #{tpu_custom_call.1} parent=15 // pred_fallthru
          _
        // Predicated region
        $region21: #{tpu_custom_call.1} parent=15 // pred_check
          %p153 = pneg %p81
        $region22: #{tpu_custom_call.1} parent=15 // pred_check_branch
          %155 = sbr.rel (%p153) target = $region24
        $region23: #{tpu_custom_call.1} parent=15 // pred_region
          %s156 = sand.u32 %s71, 1
          %s157 = scalar_lea.sflag [#allocation8], %s156
          %s158 = sand.u32 %s71, 1
          %s159 = smul.addr %s158, 32
          %s160 = scalar_lea.vmem [#allocation7], %s159
          %s161 = sadd.s32 %s26, %s27
          %s163 = ssub.s32 512, 512
          %164 = vsyncadd %s157, %s163
          %s165 = smul.addr %s161, 128
          %s166 = scalar_lea.hbm %s2, %s165
          %s167 = sshll.u32 %s160, 4
          %s168 = int_to_ptr.vmem [resolvable:$true] %s167
          %173 = dma.hbm_to_vmem [thread:$0]  %s166, 512, %s168, %s157, 256, 128, 8
        $region24: #{tpu_custom_call.1} parent=15 // pred_fallthru
          _
      $region16: #{tpu_custom_call.1} parent=5 // pred_fallthru
        _
      %p174 = scmp.le.s32.totalorder 1, %s19
      %p175 = scmp.lt.s32.totalorder %s19, 3
      %p176 = pnand %p174, %p175
      %p177 = pneg %p176
      // Predicated region
      $region25: #{tpu_custom_call.1} parent=5 // pred_check
        _
      $region26: #{tpu_custom_call.1} parent=5 // pred_check_branch
        %179 = sbr.rel (%p176) target = $region28
      $region27: #{tpu_custom_call.1} parent=5 // pred_region
        %s180 = ssub.s32 %s19, 1
        %s181 = sand.u32 %s46, 1
        %s182 = scalar_lea.sflag [#allocation5], %s181
        %s183 = sand.u32 %s46, 1
        %s184 = smul.addr %s183, 32
        %s185 = scalar_lea.vmem [#allocation4], %s184
        // Predicated region
        $region29: #{tpu_custom_call.1} parent=27 // pred_check
          %p186 = pneg %p59
        $region30: #{tpu_custom_call.1} parent=27 // pred_check_branch
          %188 = sbr.rel (%p186) target = $region32
        $region31: #{tpu_custom_call.1} parent=27 // pred_region
          %189 = dma.done %s182, 512
        $region32: #{tpu_custom_call.1} parent=27 // pred_fallthru
          _
        %s190 = sand.u32 %s74, 1
        %s191 = scalar_lea.sflag [#allocation8], %s190
        %s192 = sand.u32 %s74, 1
        %s193 = smul.addr %s192, 32
        %s194 = scalar_lea.vmem [#allocation7], %s193
        // Predicated region
        $region33: #{tpu_custom_call.1} parent=27 // pred_check
          %p195 = pneg %p87
        $region34: #{tpu_custom_call.1} parent=27 // pred_check_branch
          %197 = sbr.rel (%p195) target = $region36
        $region35: #{tpu_custom_call.1} parent=27 // pred_region
          %198 = dma.done %s191, 512
        $region36: #{tpu_custom_call.1} parent=27 // pred_fallthru
          _
        %s199 = sand.u32 %s46, 1
        %s200 = scalar_lea.sflag [#allocation5], %s199
        %s201 = sand.u32 %s46, 1
        %s202 = smul.addr %s201, 32
        %s203 = scalar_lea.vmem [#allocation4], %s202
        %p204 = pneg %p59
        %p205 = pneg %p56
        %s206 = sand.u32 %s74, 1
        %s207 = scalar_lea.sflag [#allocation8], %s206
        %s208 = sand.u32 %s74, 1
        %s209 = smul.addr %s208, 32
        %s210 = scalar_lea.vmem [#allocation7], %s209
        %p211 = pneg %p87
        %p212 = pneg %p84
        %p213 = pneg %p113
        %p214 = pneg %p110
        %s215 = sand.u32 %s100, 1
        %s216 = scalar_lea.sflag [#allocation6], %s215
        %s217 = sand.u32 %s100, 1
        %s218 = smul.addr %s217, 8
        %s219 = scalar_lea.vmem [#allocation9], %s218
        %s220 = sadd.s32 %s28, %s29
        %s221 = sadd.s32 %s28, %s29
        %p222 = scmp.eq.s32.totalorder %s29, 0
        // Predicated region
        $region37: #{tpu_custom_call.1} parent=27 // pred_check
          %p223 = pneg %p222
        $region38: #{tpu_custom_call.1} parent=27 // pred_check_branch
          %225 = sbr.rel (%p223) target = $region40
        $region39: #{tpu_custom_call.1} parent=27 // pred_region
          %226 = vst [vmem:[%s219] sm:$0xff] 0.0
        $region40: #{tpu_custom_call.1} parent=27 // pred_fallthru
          _
        %v227 = vld [vmem:[%s185] sm:$0xff]
        %s228 = scalar_lea.vmem %s185, 8 [#allocation4]
        %v229 = vld [vmem:[%s228] sm:$0xff]
        %s230 = scalar_lea.vmem %s185, 16 [#allocation4]
        %v231 = vld [vmem:[%s230] sm:$0xff]
        %s232 = scalar_lea.vmem %s185, 24 [#allocation4]
        %v233 = vld [vmem:[%s232] sm:$0xff]
        %v234 = vld [vmem:[%s194] sm:$0xff]
        %s235 = scalar_lea.vmem %s194, 8 [#allocation7]
        %v236 = vld [vmem:[%s235] sm:$0xff]
        %s237 = scalar_lea.vmem %s194, 16 [#allocation7]
        %v238 = vld [vmem:[%s237] sm:$0xff]
        %s239 = scalar_lea.vmem %s194, 24 [#allocation7]
        %v240 = vld [vmem:[%s239] sm:$0xff]
        %v241 = vmax.f32 %v227, %v234
        %v242 = vmax.f32 %v229, %v236
        %v243 = vmin.f32 %v231, %v238
        %v244 = vmin.f32 %v233, %v240
        %v245 = vsub.f32 %v243, %v241
        %v246 = vmax.f32 %v245, 0.0
        %v247 = vsub.f32 %v244, %v242
        %v248 = vmax.f32 %v247, 0.0
        %v249 = vmul.f32 %v246, %v248
        %v250 = vsub.f32 %v231, %v227
        %v251 = vsub.f32 %v233, %v229
        %v252 = vsub.f32 %v238, %v234
        %v253 = vsub.f32 %v240, %v236
        %v254 = vmul.f32 %v250, %v251
        %v255 = vmul.f32 %v252, %v253
        %v256 = vadd.f32 %v254, %v255
        %v257 = vsub.f32 %v256, %v249
        %v258 = vadd.f32 %v257, 1e-07
        %v259 = vrcp.pop %v258
        %v260 = vmul.f32 %v258, %v259
        %v261 = vsub.f32 2.0, %v260
        %v262 = vmul.f32 %v259, %v261
        %v263 = vmul.f32 %v249, %v262
        %v264 = vmax.f32 %v231, %v238
        %v265 = vmin.f32 %v227, %v234
        %v266 = vsub.f32 %v264, %v265
        %v267 = vmax.f32 %v233, %v240
        %v268 = vmin.f32 %v229, %v236
        %v269 = vsub.f32 %v267, %v268
        %v270 = vmul.f32 %v266, %v266
        %v271 = vmul.f32 %v269, %v269
        %v272 = vadd.f32 %v270, %v271
        %v273 = vadd.f32 %v272, 1e-07
        %v274 = vadd.f32 %v227, %v231
        %v275 = vadd.f32 %v234, %v238
        %v276 = vsub.f32 %v274, %v275
        %v277 = vmul.f32 %v276, 0.5
        %v278 = vadd.f32 %v229, %v233
        %v279 = vadd.f32 %v236, %v240
        %v280 = vsub.f32 %v278, %v279
        %v281 = vmul.f32 %v280, 0.5
        %v282 = vmul.f32 %v277, %v277
        %v283 = vmul.f32 %v281, %v281
        %v284 = vadd.f32 %v282, %v283
        %v285 = vsub.f32 1.0, %v263
        %v286 = vrcp.pop %v273
        %v287 = vmul.f32 %v273, %v286
        %v288 = vsub.f32 2.0, %v287
        %v289 = vmul.f32 %v286, %v288
        %v290 = vmul.f32 %v284, %v289
        %v291 = vadd.f32 %v285, %v290
        %v292 = vmul.f32 %v252, %v251
        %v293 = vmul.f32 %v250, %v253
        %v294 = vsub.f32 %v292, %v293
        %v295 = vmul.f32 %v253, %v251
        %v296 = vmul.f32 %v252, %v250
        %v297 = vadd.f32 %v295, %v296
        %v298 = vrcp.pop %v297
        %v299 = vmul.f32 %v297, %v298
        %v300 = vsub.f32 2.0, %v299
        %v301 = vmul.f32 %v298, %v300
        %v302 = vmul.f32 %v294, %v301
        %v303 = vand.u32 2147483647, %v302
        %vm304 = vcmp.gt.f32.partialorder %v303, 1.0
        %v305 = vrcp.pop %v303
        %v306 = vmul.f32 %v303, %v305
        %v307 = vsub.f32 2.0, %v306
        %v308 = vmul.f32 %v305, %v307
        %v309 = vsel %vm304, %v308, %v303
        %vm310 = vcmp.gt.f32.partialorder %v309, 0.41421357
        %v311 = vsub.f32 %v309, 1.0
        %v312 = vadd.f32 %v309, 1.0
        %v313 = vrcp.pop %v312
        %v314 = vmul.f32 %v312, %v313
        %v315 = vsub.f32 2.0, %v314
        %v316 = vmul.f32 %v313, %v315
        %v317 = vmul.f32 %v311, %v316
        %v318 = vsel %vm310, %v317, %v309
        %v319 = vmul.f32 %v318, %v318
        %v320 = vmul.f32 %v319, 0.07692308
        %v321 = vadd.f32 %v320, -0.09090909
        %v322 = vmul.f32 %v319, %v321
        %v323 = vadd.f32 %v322, 0.11111111
        %v324 = vmul.f32 %v319, %v323
        %v325 = vadd.f32 %v324, -0.14285715
        %v326 = vmul.f32 %v319, %v325
        %v327 = vadd.f32 %v326, 0.2
        %v328 = vmul.f32 %v319, %v327
        %v329 = vadd.f32 %v328, -0.33333334
        %v330 = vmul.f32 %v319, %v329
        %v331 = vadd.f32 %v330, 1.0
        %v332 = vmul.f32 %v318, %v331
        %v333 = vadd.f32 %v332, 0.7853982
        %v334 = vsel %vm310, %v333, %v332
        %v335 = vsub.f32 1.5707964, %v334
        %v336 = vsel %vm304, %v335, %v334
        %vm337 = vcmp.lt.f32.partialorder %v302, 0.0
        %v338 = vsub.f32 0.0, %v336
        %v339 = vsel %vm337, %v338, %v336
        %v340 = vmul.f32 %v339, 0.40528473
        %v341 = vmul.f32 %v340, %v339
        %v342 = vadd.f32 %v285, %v341
        %v343 = vadd.f32 %v342, 1e-07
        %v344 = vrcp.pop %v343
        %v345 = vmul.f32 %v343, %v344
        %v346 = vsub.f32 2.0, %v345
        %v347 = vmul.f32 %v344, %v346
        %v348 = vmul.f32 %v341, %v347
        %v349 = vmul.f32 %v348, %v341
        %v350 = vadd.f32 %v291, %v349
        %s351 = sld [smem:[#allocation3]]
        %s352 = sadd.s32 %s28, %s29
        %s353 = sadd.s32 %s352, 1
        %s354 = smul.u32 %s353, 1024
        %p355 = scmp.gt.s32.totalorder %s354, %s351
        %p356 = scmp.le.s32.totalorder %s354, %s351
        // Predicated region
        $region41: #{tpu_custom_call.1} parent=27 // pred_check
          %p357 = pneg %p356
        $region42: #{tpu_custom_call.1} parent=27 // pred_check_branch
          %359 = sbr.rel (%p357) target = $region44
        $region43: #{tpu_custom_call.1} parent=27 // pred_region
          %v360 = vld [vmem:[%s219] sm:$0xff]
          %v361 = vadd.f32 %v350, 0.0
          %v362 = vadd.f32 %v360, %v361
          %363 = vst [vmem:[%s219] sm:$0xff] %v362
        $region44: #{tpu_custom_call.1} parent=27 // pred_fallthru
          _
        // Predicated region
        $region45: #{tpu_custom_call.1} parent=27 // pred_check
          %p364 = pneg %p355
        $region46: #{tpu_custom_call.1} parent=27 // pred_check_branch
          %366 = sbr.rel (%p364) target = $region48
        $region47: #{tpu_custom_call.1} parent=27 // pred_region
          %v367 = vlaneseq
          %v368 = vshrl.u32 %v367, 7
          %v369 = vlaneseq
          %v370 = vand.u32 %v369, 127
          %s371 = smul.u32 %s352, 8
          %v372 = vstv %s371
          %v373 = vadd.s32 %v372, %v368
          %v374 = vmul.u32 %v373, 128
          %v375 = vadd.s32 %v374, %v370
          %v376 = vstv %s351
          %vm377 = vcmp.lt.s32.totalorder %v375, %v376
          %v378 = vsel %vm377, %v350, 0.0
          %v379 = vld [vmem:[%s219] sm:$0xff]
          %v380 = vadd.f32 %v378, 0.0
          %v381 = vadd.f32 %v379, %v380
          %382 = vst [vmem:[%s219] sm:$0xff] %v381
        $region48: #{tpu_custom_call.1} parent=27 // pred_fallthru
          _
        %s383 = sand.u32 %s100, 1
        %s384 = scalar_lea.sflag [#allocation6], %s383
        %s385 = sand.u32 %s100, 1
        %s386 = smul.addr %s385, 8
        %s387 = scalar_lea.vmem [#allocation9], %s386
        // Predicated region
        $region49: #{tpu_custom_call.1} parent=27 // pred_check
          %p388 = pneg %p110
        $region50: #{tpu_custom_call.1} parent=27 // pred_check_branch
          %390 = sbr.rel (%p388) target = $region52
        $region51: #{tpu_custom_call.1} parent=27 // pred_region
          %s392 = ssub.s32 128, 128
          %393 = vsyncadd %s384, %s392
          %s394 = smul.addr %s28, 128
          %s395 = scalar_lea.hbm %s3, %s394
          %s397 = sshll.u32 %s387, 4
          %s398 = int_to_ptr.vmem [resolvable:$true] %s397
          %400 = dma.vmem_to_hbm [thread:$0]  %s398, 128, %s395, %s384
        $region52: #{tpu_custom_call.1} parent=27 // pred_fallthru
          _
      $region28: #{tpu_custom_call.1} parent=5 // pred_fallthru
        _
      %p401 = scmp.le.s32.totalorder 2, %s19
      // Predicated region
      $region53: #{tpu_custom_call.1} parent=5 // pred_check
        %p402 = pneg %p401
      $region54: #{tpu_custom_call.1} parent=5 // pred_check_branch
        %404 = sbr.rel (%p402) target = $region56
      $region55: #{tpu_custom_call.1} parent=5 // pred_region
        %s405 = ssub.s32 %s19, 2
        // Predicated region
        $region57: #{tpu_custom_call.1} parent=55 // pred_check
          %p406 = pneg %p116
        $region58: #{tpu_custom_call.1} parent=55 // pred_check_branch
          %408 = sbr.rel (%p406) target = $region60
        $region59: #{tpu_custom_call.1} parent=55 // pred_region
          %s409 = sand.u32 %s101, 1
          %s410 = scalar_lea.sflag [#allocation6], %s409
          %s411 = sand.u32 %s101, 1
          %s412 = smul.addr %s411, 8
          %s413 = scalar_lea.vmem [#allocation9], %s412
          %414 = dma.done %s410, 128
        $region60: #{tpu_custom_call.1} parent=55 // pred_fallthru
          _
      $region56: #{tpu_custom_call.1} parent=5 // pred_fallthru
        _
    $region6: #{tpu_custom_call.1} parent=1 // loop_footer
      %s23 = sadd.s32 1, %s19
    $region7: #{tpu_custom_call.1} parent=1 // loop_footer_branch
      %18 = sbr.rel target = $region3
    $region8: #{tpu_custom_call.1} parent=1 // loop_exit
      _
    %415 = vsyncpa [#allocation5], 1
    %s416 = scalar_lea.sflag [#allocation5], 1
    %417 = vsyncpa %s416, 1
    %418 = vsyncpa [#allocation8], 1
    %s419 = scalar_lea.sflag [#allocation8], 1
    %420 = vsyncpa %s419, 1
    %421 = vsyncpa [#allocation6], 1
    %s422 = scalar_lea.sflag [#allocation6], 1
    %423 = vsyncpa %s422, 1

</llo_original>
